<compile_context>
chip_gen: v7x
topology: tpu7x:2x2x1
jax: 0.10.0
libtpu: 0.0.40
codegen_flags: <defaults>
</compile_context>

<pallas_src>
import math

import jax
import jax.numpy as jnp
from jax.experimental import pallas as pl
from jax.experimental.pallas import tpu as pltpu


def _make_block_kernel(H, W, cin, cmid, cout):
    """Build the fused two-layer conv3x3+ReLU kernel for fixed static shapes."""

    def conv3x3_relu(x, wband, brow, c_in):
        # x:     (H, W*c_in)                channels-packed activation (f32)
        # wband: (3*(W+2)*c_in, W*c_out)    per-kh banded weights (see wrapper)
        # brow:  (1, W*c_out)               channel-tiled bias row
        # In-kernel zero padding: W via zero lane strips, H via zero rows.
        zc = jnp.zeros((H, c_in), dtype=x.dtype)
        xw = jnp.concatenate([zc, x, zc], axis=1)              # (H, (W+2)*c_in)
        zr = jnp.zeros((1, (W + 2) * c_in), dtype=x.dtype)
        xp = jnp.concatenate([zr, xw, zr], axis=0)             # (H+2, (W+2)*c_in)
        # Only full-lane sublane slices (kh row shifts); one 3-way concat.
        patch = jnp.concatenate(
            [xp[kh:kh + H, :] for kh in range(3)], axis=1)     # (H, 3*(W+2)*c_in)
        acc = jnp.dot(patch, wband, preferred_element_type=jnp.float32)
        return jnp.maximum(acc + brow, 0.0)                    # bias + fused ReLU

    def kernel(x_ref, w1_ref, b1_ref, w2_ref, b2_ref, o_ref):
        x = x_ref[0]                                           # (H, W*cin)
        h1 = conv3x3_relu(x, w1_ref[...], b1_ref[...], cin)    # (H, W*cmid), VMEM-resident
        h2 = conv3x3_relu(h1, w2_ref[...], b2_ref[...], cmid)  # (H, W*cout)
        o_ref[...] = h2.reshape(1, H, W * cout).astype(o_ref.dtype)

    return kernel


def _banded_weight(w_oihw, W):
    """PyTorch OIHW (Cout,Cin,3,3) -> (3*(W+2)*Cin, W*Cout) banded im2col weight.

    For each kh, the block is a ((W+2)*Cin, W*Cout) banded matrix: output
    column block w reads padded-width blocks w, w+1, w+2 with the (Cin,Cout)
    mixing matrices w[kh, 0..2].  A channels-packed padded tap
    (H, (W+2)*Cin) times this block yields the channels-packed (H, W*Cout)
    contribution of row-offset kh; stacking the three kh blocks lets one
    matmul do the whole 3x3 convolution.
    """
    w_hwio = jnp.transpose(w_oihw, (2, 3, 1, 0)).astype(jnp.float32)  # (3,3,Cin,Cout)
    blocks = []
    for kh in range(3):
        blk = None
        for kw in range(3):
            # (W+2, W) shift matrix: S[w+kw, w] = 1
            shift = jnp.zeros((W + 2, W), dtype=w_hwio.dtype)
            shift = shift.at[jnp.arange(W) + kw, jnp.arange(W)].set(1.0)
            term = jnp.kron(shift, w_hwio[kh, kw])             # ((W+2)*Cin, W*Cout)
            blk = term if blk is None else blk + term
        blocks.append(blk)
    return jnp.concatenate(blocks, axis=0)                     # (3*(W+2)*Cin, W*Cout)


def block_forward(x_nchw, params):
    """Forward pass of `Block` on NCHW input (PyTorch convention)."""
    (w1, b1), (w2, b2) = params
    N, cin, H, W = x_nchw.shape
    cmid, cout = w1.shape[0], w2.shape[0]

    # NCHW -> NHWC -> channels-packed lane-dense (N, H, W*Cin). Pure layout glue.
    x_packed = jnp.transpose(x_nchw, (0, 2, 3, 1)).reshape(N, H, W * cin)

    w1_band = _banded_weight(w1, W)                            # (3*(W+2)*cin,  W*cmid)
    w2_band = _banded_weight(w2, W)                            # (3*(W+2)*cmid, W*cout)
    b1_row = jnp.tile(b1, W).reshape(1, W * cmid)
    b2_row = jnp.tile(b2, W).reshape(1, W * cout)

    kernel = _make_block_kernel(H, W, cin, cmid, cout)

    out_packed = pl.pallas_call(
        kernel,
        out_shape=jax.ShapeDtypeStruct((N, H, W * cout), x_nchw.dtype),
        grid_spec=pltpu.PrefetchScalarGridSpec(
            num_scalar_prefetch=0,
            grid=(N,),  # >=2 parallel steps so v7x can use both TensorCores
            in_specs=[
                pl.BlockSpec((1, H, W * cin), lambda n: (n, 0, 0)),
                pl.BlockSpec((3 * (W + 2) * cin, W * cmid), lambda n: (0, 0)),
                pl.BlockSpec((1, W * cmid), lambda n: (0, 0)),
                pl.BlockSpec((3 * (W + 2) * cmid, W * cout), lambda n: (0, 0)),
                pl.BlockSpec((1, W * cout), lambda n: (0, 0)),
            ],
            out_specs=pl.BlockSpec((1, H, W * cout), lambda n: (n, 0, 0)),
        ),
        compiler_params=pltpu.CompilerParams(
            dimension_semantics=("parallel",),
        ),
    )(x_packed, w1_band, b1_row, w2_band, b2_row)

    # Channels-packed (N, H, W*Cout) -> NHWC -> NCHW.
    return jnp.transpose(out_packed.reshape(N, H, W, cout), (0, 3, 1, 2))


def init_conv_params(key, in_channels, out_channels):
    """Deterministic init matching nn.Conv2d defaults (kaiming-uniform-ish)."""
    k_w, k_b = jax.random.split(key)
    fan_in = in_channels * 3 * 3
    bound = 1.0 / math.sqrt(fan_in)
    # PyTorch weight layout: (Cout, Cin, 3, 3)
    w_oihw = jax.random.uniform(
        k_w, (out_channels, in_channels, 3, 3),
        minval=-bound, maxval=bound, dtype=jnp.float32)
    b = jax.random.uniform(
        k_b, (out_channels,), minval=-bound, maxval=bound, dtype=jnp.float32)
    return w_oihw, b


def _reference_forward(x_nchw, params):
    """Pure-JAX reference (lax conv) for a correctness check."""
    (w1, b1), (w2, b2) = params
    y = x_nchw
    for w, b in ((w1, b1), (w2, b2)):
        y = jax.lax.conv_general_dilated(
            y, w, window_strides=(1, 1), padding=((1, 1), (1, 1)),
            dimension_numbers=("NCHW", "OIHW", "NCHW"))
        y = jnp.maximum(y + b[None, :, None, None], 0.0)
    return y


if __name__ == "__main__":
    key = jax.random.PRNGKey(0)
    k_x, k_c1, k_c2 = jax.random.split(key, 3)

    # Block(in_channels=4, middle_channels=8, out_channels=4)
    in_ch, mid_ch, out_ch = 4, 8, 4
    N, H, W = 2, 16, 16

    x = jax.random.normal(k_x, (N, in_ch, H, W), dtype=jnp.float32)
    params = (
        init_conv_params(k_c1, in_ch, mid_ch),
        init_conv_params(k_c2, mid_ch, out_ch),
    )

    out = block_forward(x, params)
    out = jax.block_until_ready(out)

    ref = _reference_forward(x, params)
    assert out.shape == (N, out_ch, H, W)
    assert jnp.allclose(out, ref, atol=1e-4, rtol=1e-4)

    print("KERNEL_OK")
</pallas_src>

<mosaic_0001>
module attributes {stable_mosaic.version = 11 : i64} {
  func.func @kernel(%arg0: i32, %arg1: memref<1x16x64xf32, #tpu.memory_space<vmem>>, %arg2: memref<216x128xf32, #tpu.memory_space<vmem>>, %arg3: memref<1x128xf32, #tpu.memory_space<vmem>>, %arg4: memref<432x64xf32, #tpu.memory_space<vmem>>, %arg5: memref<1x64xf32, #tpu.memory_space<vmem>>, %arg6: memref<1x16x64xf32, #tpu.memory_space<vmem>>) attributes {dimension_semantics = [#tpu.dimension_semantics<parallel>], iteration_bounds = array<i64: 2>, scalar_prefetch = 0 : i64, scratch_operands = 0 : i64, tpu.core_type = #tpu.core_type<tc>, window_params = [{transform_indices = @transform_0, window_bounds = array<i64: 1, 16, 64>}, {pipeline_mode = #tpu.pipeline_mode<synchronous>, transform_indices = @transform_1, window_bounds = array<i64: 216, 128>}, {pipeline_mode = #tpu.pipeline_mode<synchronous>, transform_indices = @transform_2, window_bounds = array<i64: 1, 128>}, {pipeline_mode = #tpu.pipeline_mode<synchronous>, transform_indices = @transform_3, window_bounds = array<i64: 432, 64>}, {pipeline_mode = #tpu.pipeline_mode<synchronous>, transform_indices = @transform_4, window_bounds = array<i64: 1, 64>}, {transform_indices = @transform_5, window_bounds = array<i64: 1, 16, 64>}]} {
    %c0 = arith.constant 0 : index
    %c0_0 = arith.constant 0 : index
    %c0_1 = arith.constant 0 : index
    %0 = vector.load %arg1[%c0, %c0_0, %c0_1] : memref<1x16x64xf32, #tpu.memory_space<vmem>>, vector<1x16x64xf32>
    %1 = vector.shape_cast %0 : vector<1x16x64xf32> to vector<16x64xf32>
    %c0_2 = arith.constant 0 : index
    %c0_3 = arith.constant 0 : index
    %2 = vector.load %arg2[%c0_2, %c0_3] : memref<216x128xf32, #tpu.memory_space<vmem>>, vector<216x128xf32>
    %c0_4 = arith.constant 0 : index
    %c0_5 = arith.constant 0 : index
    %3 = vector.load %arg3[%c0_4, %c0_5] : memref<1x128xf32, #tpu.memory_space<vmem>>, vector<1x128xf32>
    %cst = arith.constant 0.000000e+00 : f32
    %4 = vector.broadcast %cst : f32 to vector<16x4xf32>
    %5 = tpu.concatenate %4, %1, %4 in 1 : vector<16x4xf32>, vector<16x64xf32>, vector<16x4xf32> -> vector<16x72xf32>
    %cst_6 = arith.constant 0.000000e+00 : f32
    %6 = vector.broadcast %cst_6 : f32 to vector<1x72xf32>
    %7 = tpu.concatenate %6, %5, %6 in 0 : vector<1x72xf32>, vector<16x72xf32>, vector<1x72xf32> -> vector<18x72xf32>
    %8 = vector.extract_strided_slice %7 {offsets = [0, 0], sizes = [16, 72], strides = [1, 1]} : vector<18x72xf32> to vector<16x72xf32>
    %9 = vector.extract_strided_slice %7 {offsets = [1, 0], sizes = [16, 72], strides = [1, 1]} : vector<18x72xf32> to vector<16x72xf32>
    %10 = vector.extract_strided_slice %7 {offsets = [2, 0], sizes = [16, 72], strides = [1, 1]} : vector<18x72xf32> to vector<16x72xf32>
    %11 = tpu.concatenate %8, %9, %10 in 1 : vector<16x72xf32>, vector<16x72xf32>, vector<16x72xf32> -> vector<16x216xf32>
    %cst_7 = arith.constant dense<0.000000e+00> : vector<16x128xf32>
    %12 = tpu.matmul %11, %2, %cst_7 {dimension_numbers = #tpu.dot_dimension_numbers<[1], [0], [0], [1], [0, 0, 1, 1], [], []>} : vector<16x216xf32>, vector<216x128xf32>, vector<16x128xf32> -> vector<16x128xf32>
    %13 = vector.broadcast %3 : vector<1x128xf32> to vector<16x128xf32>
    %14 = arith.addf %12, %13 : vector<16x128xf32>
    %cst_8 = arith.constant 0.000000e+00 : f32
    %15 = vector.broadcast %cst_8 : f32 to vector<16x128xf32>
    %16 = arith.maximumf %14, %15 : vector<16x128xf32>
    %c0_9 = arith.constant 0 : index
    %c0_10 = arith.constant 0 : index
    %17 = vector.load %arg4[%c0_9, %c0_10] : memref<432x64xf32, #tpu.memory_space<vmem>>, vector<432x64xf32>
    %c0_11 = arith.constant 0 : index
    %c0_12 = arith.constant 0 : index
    %18 = vector.load %arg5[%c0_11, %c0_12] : memref<1x64xf32, #tpu.memory_space<vmem>>, vector<1x64xf32>
    %cst_13 = arith.constant 0.000000e+00 : f32
    %19 = vector.broadcast %cst_13 : f32 to vector<16x8xf32>
    %20 = tpu.concatenate %19, %16, %19 in 1 : vector<16x8xf32>, vector<16x128xf32>, vector<16x8xf32> -> vector<16x144xf32>
    %cst_14 = arith.constant 0.000000e+00 : f32
    %21 = vector.broadcast %cst_14 : f32 to vector<1x144xf32>
    %22 = tpu.concatenate %21, %20, %21 in 0 : vector<1x144xf32>, vector<16x144xf32>, vector<1x144xf32> -> vector<18x144xf32>
    %23 = vector.extract_strided_slice %22 {offsets = [0, 0], sizes = [16, 144], strides = [1, 1]} : vector<18x144xf32> to vector<16x144xf32>
    %24 = vector.extract_strided_slice %22 {offsets = [1, 0], sizes = [16, 144], strides = [1, 1]} : vector<18x144xf32> to vector<16x144xf32>
    %25 = vector.extract_strided_slice %22 {offsets = [2, 0], sizes = [16, 144], strides = [1, 1]} : vector<18x144xf32> to vector<16x144xf32>
    %26 = tpu.concatenate %23, %24, %25 in 1 : vector<16x144xf32>, vector<16x144xf32>, vector<16x144xf32> -> vector<16x432xf32>
    %cst_15 = arith.constant dense<0.000000e+00> : vector<16x64xf32>
    %27 = tpu.matmul %26, %17, %cst_15 {dimension_numbers = #tpu.dot_dimension_numbers<[1], [0], [0], [1], [0, 0, 1, 1], [], []>} : vector<16x432xf32>, vector<432x64xf32>, vector<16x64xf32> -> vector<16x64xf32>
    %28 = vector.broadcast %18 : vector<1x64xf32> to vector<16x64xf32>
    %29 = arith.addf %27, %28 : vector<16x64xf32>
    %cst_16 = arith.constant 0.000000e+00 : f32
    %30 = vector.broadcast %cst_16 : f32 to vector<16x64xf32>
    %31 = arith.maximumf %29, %30 : vector<16x64xf32>
    %32 = vector.shape_cast %31 : vector<16x64xf32> to vector<1x16x64xf32>
    %c0_17 = arith.constant 0 : index
    %c0_18 = arith.constant 0 : index
    %c0_19 = arith.constant 0 : index
    %33 = vector.load %arg6[%c0_17, %c0_18, %c0_19] : memref<1x16x64xf32, #tpu.memory_space<vmem>>, vector<1x16x64xf32>
    tpu.vector_store %arg6[%c0_17, %c0_18, %c0_19], %32 {strides = array<i32>} : memref<1x16x64xf32, #tpu.memory_space<vmem>>, vector<1x16x64xf32>,
    return
  }
  func.func @transform_0(%arg0: i32) -> (i32, i32, i32) {
    %c0_i32 = arith.constant 0 : i32
    %c0_i32_0 = arith.constant 0 : i32
    %c0_i32_1 = arith.constant 0 : i32
    return %arg0, %c0_i32, %c0_i32_0 : i32, i32, i32
  }
  func.func @transform_1(%arg0: i32) -> (i32, i32) {
    %c0_i32 = arith.constant 0 : i32
    %c0_i32_0 = arith.constant 0 : i32
    %c0_i32_1 = arith.constant 0 : i32
    return %c0_i32, %c0_i32_0 : i32, i32
  }
  func.func @transform_2(%arg0: i32) -> (i32, i32) {
    %c0_i32 = arith.constant 0 : i32
    %c0_i32_0 = arith.constant 0 : i32
    %c0_i32_1 = arith.constant 0 : i32
    return %c0_i32, %c0_i32_0 : i32, i32
  }
  func.func @transform_3(%arg0: i32) -> (i32, i32) {
    %c0_i32 = arith.constant 0 : i32
    %c0_i32_0 = arith.constant 0 : i32
    %c0_i32_1 = arith.constant 0 : i32
    return %c0_i32, %c0_i32_0 : i32, i32
  }
  func.func @transform_4(%arg0: i32) -> (i32, i32) {
    %c0_i32 = arith.constant 0 : i32
    %c0_i32_0 = arith.constant 0 : i32
    %c0_i32_1 = arith.constant 0 : i32
    return %c0_i32, %c0_i32_0 : i32, i32
  }
  func.func @transform_5(%arg0: i32) -> (i32, i32, i32) {
    %c0_i32 = arith.constant 0 : i32
    %c0_i32_0 = arith.constant 0 : i32
    %c0_i32_1 = arith.constant 0 : i32
    return %arg0, %c0_i32, %c0_i32_0 : i32, i32, i32
  }
}

</mosaic_0001>

<llo_original>
// kernel: tpu_custom_call.1
$region0: #{tpu_custom_call.1}
  #allocation0 [shape = 'u32[]', space=smem, size = 0x4, offset = 0x4, fixed_abs, tag = 'smem constant byte address 0x4 - core index']
  #allocation1 [shape = 'u32[144,128]{1,0:T(1,128)}', space=vmem, size = 0x12000, scoped, tag = 'internal scratch']
  %s0 = inlined_call_operand.vmem [shape: f32[2,16,64], index: 0, kind: input, shape index: {}]
  %s1 = inlined_call_operand.vmem [shape: f32[216,128], index: 1, kind: input, shape index: {}]
  %s2 = inlined_call_operand.vmem [shape: f32[1,128], index: 2, kind: input, shape index: {}]
  %s3 = inlined_call_operand.vmem [shape: f32[432,64], index: 3, kind: input, shape index: {}]
  %s4 = inlined_call_operand.vmem [shape: f32[1,64], index: 4, kind: input, shape index: {}]
  %s5 = inlined_call_operand.hbm [shape: f32[2,16,64], index: 5, kind: output, shape index: {}]
  %s6 = sld [smem:[#allocation0]]
  $region53: #{tpu_custom_call.1} parent=0
    _
  %s8 = ssub.s32 1, %s6
  %s9 = scalar_select 0, %s8, %s6
  $region1: #{tpu_custom_call.1} parent=0
    #allocation2 [shape = 'u8[16384]{0}', space=vmem, size = 0x4000, scoped, tag = 'output window, operand 0']
    #allocation3 [shape = 's32[2]{0}', space=sflag, size = 0x8, scoped, tag = 'scoped memory for tpu_custom_call.1']
    %10 = vsyncpa [#allocation3], 0
    %s11 = scalar_lea.sflag [#allocation3], 1
    %12 = vsyncpa %s11, 0
    loop: start=0, step=1, limit=4
    $region2: #{tpu_custom_call.1} parent=1 // loop_pre_header
      _
    $region3: #{tpu_custom_call.1} parent=1 // loop_header
      %s14 = sphi 0, %s18
      %p15 = scmp.ge.s32.totalorder %s14, 4
      %s24 = sphi 0, %s26
      %s27 = sphi 0, %s24
      %s28 = sphi 0, %s27
      %s44 = sphi 0, %s28
      %s48 = sphi 0, %s48
      %s50 = sphi 0, %s48
      %s51 = sphi 0, %s50
      %s65 = sphi 0, %s51
      %s69 = sphi 0, %s69
      %s71 = sphi 0, %s69
      %s72 = sphi 0, %s71
      %s86 = sphi 0, %s72
      %s90 = sphi 0, %s90
      %s92 = sphi 0, %s90
      %s93 = sphi 0, %s92
      %s107 = sphi 0, %s93
      %s111 = sphi 0, %s111
      %s113 = sphi 0, %s111
      %s114 = sphi 0, %s113
      %s128 = sphi 0, %s114
      %s134 = sphi 0, %s136
      %s137 = sphi 0, %s134
      %s138 = sphi 0, %s137
      %s154 = sphi 0, %s138
    $region4: #{tpu_custom_call.1} parent=1 // loop_header_branch
      %17 = sbr.rel (%p15) target = $region8
    $region5: #{tpu_custom_call.1} parent=1 // loop_body
      %s19 = ssub.s32 %s14, 1
      %s20 = ssub.s32 %s14, 2
      %s21 = sadd.s32 %s14, 1
      %s22 = ssub.s32 %s14, %s21
      %p23 = scmp.eq.s32.totalorder %s22, 0
      %s25 = sadd.s32 %s24, 1
      %s26 = scalar_select %p23, %s24, %s25
      %p29 = pneg %p23
      %p30 = scmp.eq.s32.totalorder %s14, 1
      %p31 = por %p29, %p30
      %p32 = scmp.ne.s32.totalorder %s24, %s27
      %p33 = scmp.eq.s32.totalorder %s14, 0
      %p34 = por %p32, %p33
      %p35 = scmp.ne.s32.totalorder %s24, %s27
      %p36 = scmp.eq.s32.totalorder %s19, 1
      %p37 = por %p35, %p36
      %p38 = scmp.ne.s32.totalorder %s27, %s28
      %p39 = scmp.eq.s32.totalorder %s19, 0
      %p40 = por %p38, %p39
      %p41 = scmp.ne.s32.totalorder %s27, %s28
      %p42 = scmp.eq.s32.totalorder %s20, 1
      %p43 = por %p41, %p42
      %p45 = scmp.ne.s32.totalorder %s28, %s44
      %p46 = scmp.eq.s32.totalorder %s20, 0
      %p47 = por %p45, %p46
      %s49 = sadd.s32 %s48, 1
      %p52 = scmp.eq.s32.totalorder %s14, 1
      %p53 = scmp.ne.s32.totalorder %s48, %s50
      %p54 = scmp.eq.s32.totalorder %s14, 0
      %p55 = por %p53, %p54
      %p56 = scmp.ne.s32.totalorder %s48, %s50
      %p57 = scmp.eq.s32.totalorder %s19, 1
      %p58 = por %p56, %p57
      %p59 = scmp.ne.s32.totalorder %s50, %s51
      %p60 = scmp.eq.s32.totalorder %s19, 0
      %p61 = por %p59, %p60
      %p62 = scmp.ne.s32.totalorder %s50, %s51
      %p63 = scmp.eq.s32.totalorder %s20, 1
      %p64 = por %p62, %p63
      %p66 = scmp.ne.s32.totalorder %s51, %s65
      %p67 = scmp.eq.s32.totalorder %s20, 0
      %p68 = por %p66, %p67
      %s70 = sadd.s32 %s69, 1
      %p73 = scmp.eq.s32.totalorder %s14, 1
      %p74 = scmp.ne.s32.totalorder %s69, %s71
      %p75 = scmp.eq.s32.totalorder %s14, 0
      %p76 = por %p74, %p75
      %p77 = scmp.ne.s32.totalorder %s69, %s71
      %p78 = scmp.eq.s32.totalorder %s19, 1
      %p79 = por %p77, %p78
      %p80 = scmp.ne.s32.totalorder %s71, %s72
      %p81 = scmp.eq.s32.totalorder %s19, 0
      %p82 = por %p80, %p81
      %p83 = scmp.ne.s32.totalorder %s71, %s72
      %p84 = scmp.eq.s32.totalorder %s20, 1
      %p85 = por %p83, %p84
      %p87 = scmp.ne.s32.totalorder %s72, %s86
      %p88 = scmp.eq.s32.totalorder %s20, 0
      %p89 = por %p87, %p88
      %s91 = sadd.s32 %s90, 1
      %p94 = scmp.eq.s32.totalorder %s14, 1
      %p95 = scmp.ne.s32.totalorder %s90, %s92
      %p96 = scmp.eq.s32.totalorder %s14, 0
      %p97 = por %p95, %p96
      %p98 = scmp.ne.s32.totalorder %s90, %s92
      %p99 = scmp.eq.s32.totalorder %s19, 1
      %p100 = por %p98, %p99
      %p101 = scmp.ne.s32.totalorder %s92, %s93
      %p102 = scmp.eq.s32.totalorder %s19, 0
      %p103 = por %p101, %p102
      %p104 = scmp.ne.s32.totalorder %s92, %s93
      %p105 = scmp.eq.s32.totalorder %s20, 1
      %p106 = por %p104, %p105
      %p108 = scmp.ne.s32.totalorder %s93, %s107
      %p109 = scmp.eq.s32.totalorder %s20, 0
      %p110 = por %p108, %p109
      %s112 = sadd.s32 %s111, 1
      %p115 = scmp.eq.s32.totalorder %s14, 1
      %p116 = scmp.ne.s32.totalorder %s111, %s113
      %p117 = scmp.eq.s32.totalorder %s14, 0
      %p118 = por %p116, %p117
      %p119 = scmp.ne.s32.totalorder %s111, %s113
      %p120 = scmp.eq.s32.totalorder %s19, 1
      %p121 = por %p119, %p120
      %p122 = scmp.ne.s32.totalorder %s113, %s114
      %p123 = scmp.eq.s32.totalorder %s19, 0
      %p124 = por %p122, %p123
      %p125 = scmp.ne.s32.totalorder %s113, %s114
      %p126 = scmp.eq.s32.totalorder %s20, 1
      %p127 = por %p125, %p126
      %p129 = scmp.ne.s32.totalorder %s114, %s128
      %p130 = scmp.eq.s32.totalorder %s20, 0
      %p131 = por %p129, %p130
      %s132 = ssub.s32 %s14, %s21
      %p133 = scmp.eq.s32.totalorder %s132, 0
      %s135 = sadd.s32 %s134, 1
      %s136 = scalar_select %p133, %s134, %s135
      %p139 = pneg %p133
      %p140 = scmp.eq.s32.totalorder %s14, 1
      %p141 = por %p139, %p140
      %p142 = scmp.ne.s32.totalorder %s134, %s137
      %p143 = scmp.eq.s32.totalorder %s14, 0
      %p144 = por %p142, %p143
      %p145 = scmp.ne.s32.totalorder %s134, %s137
      %p146 = scmp.eq.s32.totalorder %s19, 1
      %p147 = por %p145, %p146
      %p148 = scmp.ne.s32.totalorder %s137, %s138
      %p149 = scmp.eq.s32.totalorder %s19, 0
      %p150 = por %p148, %p149
      %p151 = scmp.ne.s32.totalorder %s137, %s138
      %p152 = scmp.eq.s32.totalorder %s20, 1
      %p153 = por %p151, %p152
      %p155 = scmp.ne.s32.totalorder %s138, %s154
      %p156 = scmp.eq.s32.totalorder %s20, 0
      %p157 = por %p155, %p156
      %p158 = scmp.le.s32.totalorder 1, %s14
      %p159 = scmp.lt.s32.totalorder %s14, 3
      %p160 = pnand %p158, %p159
      %p161 = pneg %p160
      // Predicated region
      $region9: #{tpu_custom_call.1} parent=5 // pred_check
        _
      $region10: #{tpu_custom_call.1} parent=5 // pred_check_branch
        %163 = sbr.rel (%p160) target = $region12
      $region11: #{tpu_custom_call.1} parent=5 // pred_region
        %s164 = ssub.s32 %s14, 1
        // Predicated region
        $region13: #{tpu_custom_call.1} parent=11 // pred_check
          %p165 = pneg %p61
        $region14: #{tpu_custom_call.1} parent=11 // pred_check_branch
          %167 = sbr.rel (%p165) target = $region16
        $region15: #{tpu_custom_call.1} parent=11 // pred_region
          _
        $region16: #{tpu_custom_call.1} parent=11 // pred_fallthru
          _
        // Predicated region
        $region17: #{tpu_custom_call.1} parent=11 // pred_check
          %p168 = pneg %p82
        $region18: #{tpu_custom_call.1} parent=11 // pred_check_branch
          %170 = sbr.rel (%p168) target = $region20
        $region19: #{tpu_custom_call.1} parent=11 // pred_region
          _
        $region20: #{tpu_custom_call.1} parent=11 // pred_fallthru
          _
        // Predicated region
        $region21: #{tpu_custom_call.1} parent=11 // pred_check
          %p171 = pneg %p103
        $region22: #{tpu_custom_call.1} parent=11 // pred_check_branch
          %173 = sbr.rel (%p171) target = $region24
        $region23: #{tpu_custom_call.1} parent=11 // pred_region
          _
        $region24: #{tpu_custom_call.1} parent=11 // pred_fallthru
          _
        // Predicated region
        $region25: #{tpu_custom_call.1} parent=11 // pred_check
          %p174 = pneg %p124
        $region26: #{tpu_custom_call.1} parent=11 // pred_check_branch
          %176 = sbr.rel (%p174) target = $region28
        $region27: #{tpu_custom_call.1} parent=11 // pred_region
          _
        $region28: #{tpu_custom_call.1} parent=11 // pred_fallthru
          _
      $region12: #{tpu_custom_call.1} parent=5 // pred_fallthru
        _
      %p177 = scmp.lt.s32.totalorder %s14, 2
      // Predicated region
      $region29: #{tpu_custom_call.1} parent=5 // pred_check
        %p178 = pneg %p177
      $region30: #{tpu_custom_call.1} parent=5 // pred_check_branch
        %180 = sbr.rel (%p178) target = $region32
      $region31: #{tpu_custom_call.1} parent=5 // pred_region
        // Predicated region
        $region33: #{tpu_custom_call.1} parent=31 // pred_check
          %p181 = pneg %p34
        $region34: #{tpu_custom_call.1} parent=31 // pred_check_branch
          %183 = sbr.rel (%p181) target = $region36
        $region35: #{tpu_custom_call.1} parent=31 // pred_region
          %p184 = scmp.lt.s32.totalorder %s14, 1
          %s185 = scalar_select %p184, %s14, 1
          %s186 = smul.addr %s185, 2
          %s187 = smul.addr %s186, 8
          %s188 = scalar_lea.vmem %s0, %s187
        $region36: #{tpu_custom_call.1} parent=31 // pred_fallthru
          _
      $region32: #{tpu_custom_call.1} parent=5 // pred_fallthru
        _
      %p189 = scmp.le.s32.totalorder 1, %s14
      %p190 = scmp.lt.s32.totalorder %s14, 3
      %p191 = pnand %p189, %p190
      %p192 = pneg %p191
      // Predicated region
      $region37: #{tpu_custom_call.1} parent=5 // pred_check
        _
      $region38: #{tpu_custom_call.1} parent=5 // pred_check_branch
        %194 = sbr.rel (%p191) target = $region40
      $region39: #{tpu_custom_call.1} parent=5 // pred_region
        %s195 = ssub.s32 %s14, 1
        %p196 = scmp.lt.s32.totalorder %s19, 1
        %s197 = scalar_select %p196, %s19, 1
        %s198 = smul.addr %s197, 2
        %s199 = smul.addr %s198, 8
        %s200 = scalar_lea.vmem %s0, %s199
        %p201 = pneg %p40
        %p202 = pneg %p37
        %p203 = pneg %p61
        %p204 = pneg %p58
        %p205 = pneg %p82
        %p206 = pneg %p79
        %p207 = pneg %p103
        %p208 = pneg %p100
        %p209 = pneg %p124
        %p210 = pneg %p121
        %p211 = pneg %p150
        %p212 = pneg %p147
        %s213 = sand.u32 %s137, 1
        %s214 = scalar_lea.sflag [#allocation3], %s213
        %s215 = sand.u32 %s137, 1
        %s216 = smul.addr %s215, 16
        %s217 = scalar_lea.vmem [#allocation2], %s216
        %p218 = scmp.lt.s32.totalorder %s19, 1
        %s219 = scalar_select %p218, %s19, 1
        %s220 = smul.addr %s219, 2
        %s221 = smul.addr %s220, 8
        %s222 = scalar_lea.vmem %s0, %s221
        %v223 = vld [vmem:[%s222] sm:$0xff]
        %v224 = vld [vmem:[%s222 + $0x8] sm:$0xff]
        %v225 = vld [vmem:[%s1] sm:$0xff]
        %v226 = vld [vmem:[%s1 + $0x8] sm:$0xff]
        %v227 = vld [vmem:[%s1 + $0x10] sm:$0xff]
        %v228 = vld [vmem:[%s1 + $0x18] sm:$0xff]
        %v229 = vld [vmem:[%s1 + $0x20] sm:$0xff]
        %v230 = vld [vmem:[%s1 + $0x28] sm:$0xff]
        %v231 = vld [vmem:[%s1 + $0x30] sm:$0xff]
        %v232 = vld [vmem:[%s1 + $0x38] sm:$0xff]
        %v233 = vld [vmem:[%s1 + $0x40] sm:$0xff]
        %v234 = vld [vmem:[%s1 + $0x48] sm:$0xff]
        %v235 = vld [vmem:[%s1 + $0x50] sm:$0xff]
        %v236 = vld [vmem:[%s1 + $0x58] sm:$0xff]
        %v237 = vld [vmem:[%s1 + $0x60] sm:$0xff]
        %v238 = vld [vmem:[%s1 + $0x68] sm:$0xff]
        %v239 = vld [vmem:[%s1 + $0x70] sm:$0xff]
        %v240 = vld [vmem:[%s1 + $0x78] sm:$0xff]
        %v241 = vld [vmem:[%s1 + $0x80] sm:$0xff]
        %v242 = vld [vmem:[%s1 + $0x88] sm:$0xff]
        %v243 = vld [vmem:[%s1 + $0x90] sm:$0xff]
        %v244 = vld [vmem:[%s1 + $0x98] sm:$0xff]
        %v245 = vld [vmem:[%s1 + $0xa0] sm:$0xff]
        %v246 = vld [vmem:[%s1 + $0xa8] sm:$0xff]
        %v247 = vld [vmem:[%s1 + $0xb0] sm:$0xff]
        %v248 = vld [vmem:[%s1 + $0xb8] sm:$0xff]
        %v249 = vld [vmem:[%s1 + $0xc0] sm:$0xff]
        %v250 = vld [vmem:[%s1 + $0xc8] sm:$0xff]
        %v251 = vld [vmem:[%s1 + $0xd0] sm:$0xff]
        %v252 = vld [vmem:[%s2] sm:$0x1]
        %255 = vrot.lane.b32.xlu0 %v223, 4
        %v256 = vpop.permute.xlu0 %255
        %257 = vrot.lane.b32.xlu0 %v224, 4
        %v258 = vpop.permute.xlu0 %257
        %vm261 = vcmask 31744
        %v262 = vsel %vm261, 0.0, %v256
        %v263 = vsel %vm261, 0.0, %v258
        %vm264 = vcmask 556032
        %v265 = vsel %vm264, %v262, 0.0
        %v266 = vsel %vm264, %v263, 0.0
        %vm269 = vcmask 1040384
        %v270 = vrot.slane %v265, 7
        %v271 = vrot.slane %v266, 7
        %v272 = vsel %vm269, %v270, %v271
        %v276 = vsel %vm269, 0.0, %v270
        %v277 = vsel %vm269, %v271, 0.0
        %vm280 = vcmask 1046528
        %v281 = vrot.slane %v276, 1
        %v282 = vrot.slane %v272, 1
        %v283 = vsel %vm280, %v281, %v282
        %v284 = vrot.slane %v277, 1
        %v285 = vsel %vm280, %v282, %v284
        %286 = vrot.lane.b32.xlu0 %v283, 72
        %v287 = vpop.permute.xlu0 %286
        %288 = vrot.lane.b32.xlu0 %v285, 72
        %v289 = vpop.permute.xlu0 %288
        %vm292 = vcmask 1045504
        %v293 = vrot.slane %v276, 2
        %v294 = vrot.slane %v272, 2
        %v295 = vsel %vm292, %v293, %v294
        %v296 = vrot.slane %v277, 2
        %v297 = vsel %vm292, %v294, %v296
        %298 = vrot.lane.b32.xlu0 %v295, 16
        %v299 = vpop.permute.xlu0 %298
        %300 = vrot.lane.b32.xlu0 %v297, 16
        %v301 = vpop.permute.xlu0 %300
        %vm304 = vcmask 588800
        %v305 = vsel %vm304, %v276, %v287
        %v306 = vsel %vm304, %v272, %v289
        %vm307 = vcmask 130048
        %v308 = vsel %vm307, %v287, %v299
        %v309 = vsel %vm307, %v289, %v301
        %v311 = vlaneseq
        %v312 = vshrl.u32 %v311, 7
        %v313 = vsub.s32 0, %v312
        %v314 = vrot.slane %v252, %v313
        %vm316 = vcmask 719872
        %v318 = vsel %vm316, %v308, 0
        %v321 = vsel %vm316, %v309, 0
        %323 = vmatprep.subr.mxu0 0.0
        %324 = vmatpush1.msra.mxu0 %v225
        %325 = vmatprep.subr.mxu0 0.0
        %326 = vmatpush1.msra.mxu0 %v226
        %327 = vmatprep.subr.mxu0 0.0
        %328 = vmatpush1.msra.mxu0 %v227
        %329 = vmatprep.subr.mxu0 0.0
        %330 = vmatpush1.msra.mxu0 %v228
        %331 = vmatprep.subr.mxu0 0.0
        %332 = vmatpush1.msra.mxu0 %v229
        %333 = vmatprep.subr.mxu0 0.0
        %334 = vmatpush1.msra.mxu0 %v230
        %335 = vmatprep.subr.mxu0 0.0
        %336 = vmatpush1.msra.mxu0 %v231
        %337 = vmatprep.subr.mxu0 0.0
        %338 = vmatpush1.msra.mxu0 %v232
        %339 = vmatprep.subr.mxu0 0.0
        %340 = vmatpush1.msra.mxu0 %v233
        %341 = vmatprep.subr.mxu0 0.0
        %342 = vmatpush1.msra.mxu0 %v234
        %343 = vmatprep.subr.mxu0 0.0
        %344 = vmatpush1.msra.mxu0 %v235
        %345 = vmatprep.subr.mxu0 0.0
        %346 = vmatpush1.msra.mxu0 %v236
        %347 = vmatprep.subr.mxu0 0.0
        %348 = vmatpush1.msra.mxu0 %v237
        %349 = vmatprep.subr.mxu0 0.0
        %350 = vmatpush1.msra.mxu0 %v238
        %351 = vmatprep.subr.mxu0 0.0
        %352 = vmatpush1.msra.mxu0 %v239
        %353 = vmatprep.subr.mxu0 0.0
        %354 = vmatpush1.msra.mxu0 %v240
        %355 = vmatprep.subr.mxu0 0.0
        %356 = vmatpush1.msra.mxu0 %v241
        %357 = vmatprep.subr.mxu0 0.0
        %358 = vmatpush1.msra.mxu0 %v242
        %359 = vmatprep.subr.mxu0 0.0
        %360 = vmatpush1.msra.mxu0 %v243
        %361 = vmatprep.subr.mxu0 0.0
        %362 = vmatpush1.msra.mxu0 %v244
        %363 = vmatprep.subr.mxu0 0.0
        %364 = vmatpush1.msra.mxu0 %v245
        %365 = vmatprep.subr.mxu0 0.0
        %366 = vmatpush1.msra.mxu0 %v246
        %367 = vmatprep.subr.mxu0 0.0
        %368 = vmatpush1.msra.mxu0 %v247
        %369 = vmatprep.subr.mxu0 0.0
        %370 = vmatpush1.msra.mxu0 %v248
        %371 = vmatprep.subr.mxu0 0.0
        %372 = vmatpush1.msra.mxu0 %v249
        %373 = vmatprep.subr.mxu0 0.0
        %374 = vmatpush1.msra.mxu0 %v250
        %375 = vmatprep.subr.mxu0 0.0
        %376 = vmatpush1.msra.mxu0 %v251
        %377 = vmatprep.subr.mxu0 0.0
        %378 = vmatpush1.msra.mxu0 0.0
        %379 = vmatprep.subr.mxu0 0.0
        %380 = vmatpush1.msra.mxu0 0.0
        %381 = vmatprep.subr.mxu0 0.0
        %382 = vmatpush1.msra.mxu0 0.0
        %383 = vmatprep.subr.mxu0 0.0
        %384 = vmatpush1.msra.mxu0 0.0
        %385 = vmatprep.subr.mxu0 0.0
        %386 = vmatpush1.msra.mxu0 0.0
        %387 = vmatprep.mubr.f32.mxu0 %v318
        %388 = vmatmul.mubr.f32.gmra.mrb[0].mxu0 %v305
        %v389 = vpop.f32.mrb[0].mxu0
        %v390 = vadd.f32 %v314, %v389
        %v391 = vpop.f32.mrb[0].mxu0
        %392 = vmatprep.mubr.f32.mxu0 %v321
        %393 = vmatmul.mubr.f32.gmra.mrb[0].mxu0 %v306
        %v394 = vpop.f32.mrb[0].mxu0
        %v395 = vadd.f32 %v314, %v394
        %v396 = vpop.f32.mrb[0].mxu0
        %397 = vdwg.mxu0
        %v398 = vmax.f32 %v390, 0.0
        %v399 = vmax.f32 %v395, 0.0
        %v400 = vld [vmem:[%s3] sm:$0xff]
        %v401 = vld [vmem:[%s3 + $0x8] sm:$0xff]
        %v402 = vld [vmem:[%s3 + $0x10] sm:$0xff]
        %v403 = vld [vmem:[%s3 + $0x18] sm:$0xff]
        %v404 = vld [vmem:[%s3 + $0x20] sm:$0xff]
        %v405 = vld [vmem:[%s3 + $0x28] sm:$0xff]
        %v406 = vld [vmem:[%s3 + $0x30] sm:$0xff]
        %v407 = vld [vmem:[%s3 + $0x38] sm:$0xff]
        %v408 = vld [vmem:[%s3 + $0x40] sm:$0xff]
        %v409 = vld [vmem:[%s3 + $0x48] sm:$0xff]
        %v410 = vld [vmem:[%s3 + $0x50] sm:$0xff]
        %v411 = vld [vmem:[%s3 + $0x58] sm:$0xff]
        %v412 = vld [vmem:[%s3 + $0x60] sm:$0xff]
        %v413 = vld [vmem:[%s3 + $0x68] sm:$0xff]
        %v414 = vld [vmem:[%s3 + $0x70] sm:$0xff]
        %v415 = vld [vmem:[%s3 + $0x78] sm:$0xff]
        %v416 = vld [vmem:[%s3 + $0x80] sm:$0xff]
        %v417 = vld [vmem:[%s3 + $0x88] sm:$0xff]
        %v418 = vld [vmem:[%s3 + $0x90] sm:$0xff]
        %v419 = vld [vmem:[%s3 + $0x98] sm:$0xff]
        %v420 = vld [vmem:[%s3 + $0xa0] sm:$0xff]
        %v421 = vld [vmem:[%s3 + $0xa8] sm:$0xff]
        %v422 = vld [vmem:[%s3 + $0xb0] sm:$0xff]
        %v423 = vld [vmem:[%s3 + $0xb8] sm:$0xff]
        %v424 = vld [vmem:[%s3 + $0xc0] sm:$0xff]
        %v425 = vld [vmem:[%s3 + $0xc8] sm:$0xff]
        %v426 = vld [vmem:[%s3 + $0xd0] sm:$0xff]
        %v427 = vld [vmem:[%s3 + $0xd8] sm:$0xff]
        %v428 = vld [vmem:[%s3 + $0xe0] sm:$0xff]
        %v429 = vld [vmem:[%s3 + $0xe8] sm:$0xff]
        %v430 = vld [vmem:[%s3 + $0xf0] sm:$0xff]
        %v431 = vld [vmem:[%s3 + $0xf8] sm:$0xff]
        %v432 = vld [vmem:[%s3 + $0x100] sm:$0xff]
        %v433 = vld [vmem:[%s3 + $0x108] sm:$0xff]
        %v434 = vld [vmem:[%s3 + $0x110] sm:$0xff]
        %v435 = vld [vmem:[%s3 + $0x118] sm:$0xff]
        %v436 = vld [vmem:[%s3 + $0x120] sm:$0xff]
        %v437 = vld [vmem:[%s3 + $0x128] sm:$0xff]
        %v438 = vld [vmem:[%s3 + $0x130] sm:$0xff]
        %v439 = vld [vmem:[%s3 + $0x138] sm:$0xff]
        %v440 = vld [vmem:[%s3 + $0x140] sm:$0xff]
        %v441 = vld [vmem:[%s3 + $0x148] sm:$0xff]
        %v442 = vld [vmem:[%s3 + $0x150] sm:$0xff]
        %v443 = vld [vmem:[%s3 + $0x158] sm:$0xff]
        %v444 = vld [vmem:[%s3 + $0x160] sm:$0xff]
        %v445 = vld [vmem:[%s3 + $0x168] sm:$0xff]
        %v446 = vld [vmem:[%s3 + $0x170] sm:$0xff]
        %v447 = vld [vmem:[%s3 + $0x178] sm:$0xff]
        %v448 = vld [vmem:[%s3 + $0x180] sm:$0xff]
        %v449 = vld [vmem:[%s3 + $0x188] sm:$0xff]
        %v450 = vld [vmem:[%s3 + $0x190] sm:$0xff]
        %v451 = vld [vmem:[%s3 + $0x198] sm:$0xff]
        %v452 = vld [vmem:[%s3 + $0x1a0] sm:$0xff]
        %v453 = vld [vmem:[%s3 + $0x1a8] sm:$0xff]
        %v454 = vld [vmem:[%s4] sm:$0x1]
        %457 = vrot.lane.b32.xlu0 %v398, 8
        %v458 = vpop.permute.xlu0 %457
        %459 = vrot.lane.b32.xlu0 %v399, 8
        %v460 = vpop.permute.xlu0 %459
        %vm463 = vcmask 64512
        %v464 = vsel %vm463, 0.0, %v458
        %v465 = vsel %vm463, 0.0, %v460
        %v466 = vsel %vm463, %v458, 0.0
        %v467 = vsel %vm463, %v460, 0.0
        %v472 = vrot.slane %v464, 7
        %v473 = vrot.slane %v466, 7
        %v474 = vrot.slane %v465, 7
        %v475 = vsel %vm269, %v472, %v474
        %v476 = vrot.slane %v467, 7
        %v477 = vsel %vm269, %v473, %v476
        %v484 = vsel %vm269, 0.0, %v472
        %v485 = vsel %vm269, 0.0, %v473
        %v486 = vsel %vm269, %v474, 0.0
        %v487 = vsel %vm269, %v476, 0.0
        %v492 = vrot.slane %v484, 1
        %v493 = vrot.slane %v475, 1
        %v494 = vsel %vm280, %v492, %v493
        %v495 = vrot.slane %v485, 1
        %v496 = vrot.slane %v477, 1
        %v497 = vsel %vm280, %v495, %v496
        %v498 = vrot.slane %v486, 1
        %v499 = vsel %vm280, %v493, %v498
        %v500 = vrot.slane %v487, 1
        %v501 = vsel %vm280, %v496, %v500
        %502 = vrot.lane.b32.xlu0 %v494, 16
        %v503 = vpop.permute.xlu0 %502
        %504 = vrot.lane.b32.xlu0 %v497, 16
        %v505 = vpop.permute.xlu0 %504
        %506 = vrot.lane.b32.xlu0 %v499, 16
        %v507 = vpop.permute.xlu0 %506
        %508 = vrot.lane.b32.xlu0 %v501, 16
        %v509 = vpop.permute.xlu0 %508
        %v510 = vsel %vm307, %v503, %v505
        %v511 = vsel %vm307, %v507, %v509
        %v516 = vrot.slane %v484, 2
        %v517 = vrot.slane %v475, 2
        %v518 = vsel %vm292, %v516, %v517
        %v519 = vrot.slane %v485, 2
        %v520 = vrot.slane %v477, 2
        %v521 = vsel %vm292, %v519, %v520
        %v522 = vrot.slane %v486, 2
        %v523 = vsel %vm292, %v517, %v522
        %v524 = vrot.slane %v487, 2
        %v525 = vsel %vm292, %v520, %v524
        %526 = vrot.lane.b32.xlu0 %v518, 32
        %v527 = vpop.permute.xlu0 %526
        %528 = vrot.lane.b32.xlu0 %v521, 32
        %v529 = vpop.permute.xlu0 %528
        %530 = vrot.lane.b32.xlu0 %v523, 32
        %v531 = vpop.permute.xlu0 %530
        %532 = vrot.lane.b32.xlu0 %v525, 32
        %v533 = vpop.permute.xlu0 %532
        %vm534 = vcmask 261120
        %v535 = vsel %vm534, %v527, %v529
        %v536 = vsel %vm534, %v531, %v533
        %v539 = vsel %vm307, %v485, %v503
        %v540 = vsel %vm307, %v477, %v507
        %v541 = vsel %vm534, %v510, %v527
        %v542 = vsel %vm534, %v511, %v531
        %v544 = vlaneseq
        %v545 = vshrl.u32 %v544, 7
        %v546 = vsub.s32 0, %v545
        %v547 = vrot.slane %v454, %v546
        %vm549 = vcmask 392192
        %v550 = vsel %vm549, %v535, 0
        %v552 = vsel %vm549, %v536, 0
        %554 = vmatprep.subr.mxu0 0.0
        %555 = vmatpush1.msra.mxu0 %v400
        %556 = vmatprep.subr.mxu0 0.0
        %557 = vmatpush1.msra.mxu0 %v401
        %558 = vmatprep.subr.mxu0 0.0
        %559 = vmatpush1.msra.mxu0 %v402
        %560 = vmatprep.subr.mxu0 0.0
        %561 = vmatpush1.msra.mxu0 %v403
        %562 = vmatprep.subr.mxu0 0.0
        %563 = vmatpush1.msra.mxu0 %v404
        %564 = vmatprep.subr.mxu0 0.0
        %565 = vmatpush1.msra.mxu0 %v405
        %566 = vmatprep.subr.mxu0 0.0
        %567 = vmatpush1.msra.mxu0 %v406
        %568 = vmatprep.subr.mxu0 0.0
        %569 = vmatpush1.msra.mxu0 %v407
        %570 = vmatprep.subr.mxu0 0.0
        %571 = vmatpush1.msra.mxu0 %v408
        %572 = vmatprep.subr.mxu0 0.0
        %573 = vmatpush1.msra.mxu0 %v409
        %574 = vmatprep.subr.mxu0 0.0
        %575 = vmatpush1.msra.mxu0 %v410
        %576 = vmatprep.subr.mxu0 0.0
        %577 = vmatpush1.msra.mxu0 %v411
        %578 = vmatprep.subr.mxu0 0.0
        %579 = vmatpush1.msra.mxu0 %v412
        %580 = vmatprep.subr.mxu0 0.0
        %581 = vmatpush1.msra.mxu0 %v413
        %582 = vmatprep.subr.mxu0 0.0
        %583 = vmatpush1.msra.mxu0 %v414
        %584 = vmatprep.subr.mxu0 0.0
        %585 = vmatpush1.msra.mxu0 %v415
        %586 = vmatprep.subr.mxu0 0.0
        %587 = vmatpush1.msra.mxu0 %v416
        %588 = vmatprep.subr.mxu0 0.0
        %589 = vmatpush1.msra.mxu0 %v417
        %590 = vmatprep.subr.mxu0 0.0
        %591 = vmatpush1.msra.mxu0 %v418
        %592 = vmatprep.subr.mxu0 0.0
        %593 = vmatpush1.msra.mxu0 %v419
        %594 = vmatprep.subr.mxu0 0.0
        %595 = vmatpush1.msra.mxu0 %v420
        %596 = vmatprep.subr.mxu0 0.0
        %597 = vmatpush1.msra.mxu0 %v421
        %598 = vmatprep.subr.mxu0 0.0
        %599 = vmatpush1.msra.mxu0 %v422
        %600 = vmatprep.subr.mxu0 0.0
        %601 = vmatpush1.msra.mxu0 %v423
        %602 = vmatprep.subr.mxu0 0.0
        %603 = vmatpush1.msra.mxu0 %v424
        %604 = vmatprep.subr.mxu0 0.0
        %605 = vmatpush1.msra.mxu0 %v425
        %606 = vmatprep.subr.mxu0 0.0
        %607 = vmatpush1.msra.mxu0 %v426
        %608 = vmatprep.subr.mxu0 0.0
        %609 = vmatpush1.msra.mxu0 %v427
        %610 = vmatprep.subr.mxu0 0.0
        %611 = vmatpush1.msra.mxu0 %v428
        %612 = vmatprep.subr.mxu0 0.0
        %613 = vmatpush1.msra.mxu0 %v429
        %614 = vmatprep.subr.mxu0 0.0
        %615 = vmatpush1.msra.mxu0 %v430
        %616 = vmatprep.subr.mxu0 0.0
        %617 = vmatpush1.msra.mxu0 %v431
        %618 = vmatprep.mubr.f32.mxu0 %v539
        %619 = vmatmul.mubr.f32.gmra.mrb[0].mxu0 %v484
        %v620 = vpop.f32.mrb[0].mxu0
        %v621 = vadd.f32 %v547, %v620
        %v622 = vpop.f32.mrb[0].mxu0
        %623 = vmatprep.mubr.f32.mxu0 %v540
        %624 = vmatmul.mubr.f32.gmra.mrb[0].mxu0 %v475
        %v625 = vpop.f32.mrb[0].mxu0
        %v626 = vadd.f32 %v547, %v625
        %v627 = vpop.f32.mrb[0].mxu0
        %628 = vdwg.mxu0
        %629 = vmatprep.subr.mxu0 0.0
        %630 = vmatpush1.msra.mxu0 %v432
        %631 = vmatprep.subr.mxu0 0.0
        %632 = vmatpush1.msra.mxu0 %v433
        %633 = vmatprep.subr.mxu0 0.0
        %634 = vmatpush1.msra.mxu0 %v434
        %635 = vmatprep.subr.mxu0 0.0
        %636 = vmatpush1.msra.mxu0 %v435
        %637 = vmatprep.subr.mxu0 0.0
        %638 = vmatpush1.msra.mxu0 %v436
        %639 = vmatprep.subr.mxu0 0.0
        %640 = vmatpush1.msra.mxu0 %v437
        %641 = vmatprep.subr.mxu0 0.0
        %642 = vmatpush1.msra.mxu0 %v438
        %643 = vmatprep.subr.mxu0 0.0
        %644 = vmatpush1.msra.mxu0 %v439
        %645 = vmatprep.subr.mxu0 0.0
        %646 = vmatpush1.msra.mxu0 %v440
        %647 = vmatprep.subr.mxu0 0.0
        %648 = vmatpush1.msra.mxu0 %v441
        %649 = vmatprep.subr.mxu0 0.0
        %650 = vmatpush1.msra.mxu0 %v442
        %651 = vmatprep.subr.mxu0 0.0
        %652 = vmatpush1.msra.mxu0 %v443
        %653 = vmatprep.subr.mxu0 0.0
        %654 = vmatpush1.msra.mxu0 %v444
        %655 = vmatprep.subr.mxu0 0.0
        %656 = vmatpush1.msra.mxu0 %v445
        %657 = vmatprep.subr.mxu0 0.0
        %658 = vmatpush1.msra.mxu0 %v446
        %659 = vmatprep.subr.mxu0 0.0
        %660 = vmatpush1.msra.mxu0 %v447
        %661 = vmatprep.subr.mxu0 0.0
        %662 = vmatpush1.msra.mxu0 %v448
        %663 = vmatprep.subr.mxu0 0.0
        %664 = vmatpush1.msra.mxu0 %v449
        %665 = vmatprep.subr.mxu0 0.0
        %666 = vmatpush1.msra.mxu0 %v450
        %667 = vmatprep.subr.mxu0 0.0
        %668 = vmatpush1.msra.mxu0 %v451
        %669 = vmatprep.subr.mxu0 0.0
        %670 = vmatpush1.msra.mxu0 %v452
        %671 = vmatprep.subr.mxu0 0.0
        %672 = vmatpush1.msra.mxu0 %v453
        %673 = vmatprep.subr.mxu0 0.0
        %674 = vmatpush1.msra.mxu0 0.0
        %675 = vmatprep.subr.mxu0 0.0
        %676 = vmatpush1.msra.mxu0 0.0
        %677 = vmatprep.subr.mxu0 0.0
        %678 = vmatpush1.msra.mxu0 0.0
        %679 = vmatprep.subr.mxu0 0.0
        %680 = vmatpush1.msra.mxu0 0.0
        %681 = vmatprep.subr.mxu0 0.0
        %682 = vmatpush1.msra.mxu0 0.0
        %683 = vmatprep.subr.mxu0 0.0
        %684 = vmatpush1.msra.mxu0 0.0
        %685 = vmatprep.subr.mxu0 0.0
        %686 = vmatpush1.msra.mxu0 0.0
        %687 = vmatprep.subr.mxu0 0.0
        %688 = vmatpush1.msra.mxu0 0.0
        %689 = vmatprep.subr.mxu0 0.0
        %690 = vmatpush1.msra.mxu0 0.0
        %691 = vmatprep.subr.mxu0 0.0
        %692 = vmatpush1.msra.mxu0 0.0
        %693 = vmatprep.mubr.f32.mxu0 %v550
        %694 = vmatmul.mubr.f32.gmra.mrb[0].mxu0 %v541
        %v695 = vpop.f32.mrb[0].mxu0
        %v696 = vadd.f32 %v621, %v695
        %v697 = vpop.f32.mrb[0].mxu0
        %698 = vmatprep.mubr.f32.mxu0 %v552
        %699 = vmatmul.mubr.f32.gmra.mrb[0].mxu0 %v542
        %v700 = vpop.f32.mrb[0].mxu0
        %v701 = vadd.f32 %v626, %v700
        %v702 = vpop.f32.mrb[0].mxu0
        %703 = vdwg.mxu0
        %v704 = vmax.f32 %v696, 0.0
        %v705 = vmax.f32 %v701, 0.0
        %vm706 = vcmask 523264
        %707 = vst.msk [vmem:[%s217] sm:$0xff] %vm706, %v704
        %708 = vst.msk [vmem:[%s217 + $0x8] sm:$0xff] %vm706, %v705
        %s709 = sand.u32 %s137, 1
        %s710 = scalar_lea.sflag [#allocation3], %s709
        %s711 = sand.u32 %s137, 1
        %s712 = smul.addr %s711, 16
        %s713 = scalar_lea.vmem [#allocation2], %s712
        // Predicated region
        $region41: #{tpu_custom_call.1} parent=39 // pred_check
          %p714 = pneg %p147
        $region42: #{tpu_custom_call.1} parent=39 // pred_check_branch
          %716 = sbr.rel (%p714) target = $region44
        $region43: #{tpu_custom_call.1} parent=39 // pred_region
          %s718 = ssub.s32 256, 256
          %719 = vsyncadd %s710, %s718
          %s720 = smul.addr %s19, 2
          %s721 = smul.addr %s720, 128
          %s722 = scalar_lea.hbm %s5, %s721
          %s723 = sshll.u32 %s713, 4
          %s724 = int_to_ptr.vmem [resolvable:$true] %s723
          %729 = dma.vmem_to_hbm [thread:$0]  %s724, 256, %s722, %s710, 128, 128, 8
        $region44: #{tpu_custom_call.1} parent=39 // pred_fallthru
          _
      $region40: #{tpu_custom_call.1} parent=5 // pred_fallthru
        _
      %p730 = scmp.le.s32.totalorder 2, %s14
      // Predicated region
      $region45: #{tpu_custom_call.1} parent=5 // pred_check
        %p731 = pneg %p730
      $region46: #{tpu_custom_call.1} parent=5 // pred_check_branch
        %733 = sbr.rel (%p731) target = $region48
      $region47: #{tpu_custom_call.1} parent=5 // pred_region
        %s734 = ssub.s32 %s14, 2
        // Predicated region
        $region49: #{tpu_custom_call.1} parent=47 // pred_check
          %p735 = pneg %p153
        $region50: #{tpu_custom_call.1} parent=47 // pred_check_branch
          %737 = sbr.rel (%p735) target = $region52
        $region51: #{tpu_custom_call.1} parent=47 // pred_region
          %s738 = sand.u32 %s138, 1
          %s739 = scalar_lea.sflag [#allocation3], %s738
          %s740 = sand.u32 %s138, 1
          %s741 = smul.addr %s740, 16
          %s742 = scalar_lea.vmem [#allocation2], %s741
          %743 = dma.done %s739, 256
        $region52: #{tpu_custom_call.1} parent=47 // pred_fallthru
          _
      $region48: #{tpu_custom_call.1} parent=5 // pred_fallthru
        _
    $region6: #{tpu_custom_call.1} parent=1 // loop_footer
      %s18 = sadd.s32 1, %s14
    $region7: #{tpu_custom_call.1} parent=1 // loop_footer_branch
      %13 = sbr.rel target = $region3
    $region8: #{tpu_custom_call.1} parent=1 // loop_exit
      _
    %744 = vsyncpa [#allocation3], 1
    %s745 = scalar_lea.sflag [#allocation3], 1
    %746 = vsyncpa %s745, 1

</llo_original>
